<compile_context>
chip_gen: v5e
topology: v5e:2x2
jax: 0.10.0
libtpu: 0.0.40
codegen_flags: <defaults>
</compile_context>

<pallas_src>
import functools

import jax
import jax.numpy as jnp
from jax.experimental import pallas as pl
from jax.experimental.pallas import tpu as pltpu

LANES = 128

# Row order of the six distinct prediction tensors (10 operand slots in the
# reference, but only 6 distinct tensors).
ROW_PRED_POS = 0   # y_pred_pos
ROW_PRED_NEG = 1   # y_pred_neg
ROW_POS_G_POS = 2  # y_pos_g_pos
ROW_POS_G_NEG = 3  # y_pos_g_neg
ROW_NEG_G_POS = 4  # y_neg_g_pos
ROW_NEG_G_NEG = 5  # y_neg_g_neg
NUM_TENSORS = 6


def _loss_con3_kernel(lam_ref, pp_ref, pn_ref, pgp_ref, pgn_ref, ngp_ref,
                      ngn_ref, out_ref, acc_ref, *, n_true, tm, needs_mask):
    # lam_ref : SMEM (3,)        float32
    # *_ref   : VMEM (tm, 128)   native dtype blocks of the six predictions
    # out_ref : VMEM (1, 1)      float32
    # acc_ref : VMEM (12, 128)   float32 scratch; rows 0..5 = lane-wise sums,
    #                            rows 6..11 = lane-wise sums of squares.
    pid = pl.program_id(0)
    last = pl.num_programs(0) - 1

    @pl.when(pid == 0)
    def _init():
        acc_ref[...] = jnp.zeros_like(acc_ref)

    if needs_mask:
        row = jax.lax.broadcasted_iota(jnp.int32, (tm, LANES), 0)
        col = jax.lax.broadcasted_iota(jnp.int32, (tm, LANES), 1)
        gidx = (pid * tm + row) * LANES + col      # global element index
        mask = gidx < n_true                       # True only for real data
    else:
        mask = None

    data_refs = (pp_ref, pn_ref, pgp_ref, pgn_ref, ngp_ref, ngn_ref)
    for r, ref in enumerate(data_refs):            # static unroll over 6 inputs
        x = ref[...].astype(jnp.float32)           # in-register promote
        if mask is not None:
            x = jnp.where(mask, x, 0.0)            # zero padded / OOB lanes
        acc_ref[r:r + 1, :] += jnp.sum(x, axis=0, keepdims=True)
        acc_ref[NUM_TENSORS + r:NUM_TENSORS + r + 1, :] += jnp.sum(
            x * x, axis=0, keepdims=True)

    @pl.when(pid == last)
    def _finalize():
        inv_n = 1.0 / float(n_true)
        m1 = []
        m2 = []
        for r in range(NUM_TENSORS):               # 12 tiny lane reductions
            s1 = jnp.sum(acc_ref[r:r + 1, :], axis=1, keepdims=True)
            s2 = jnp.sum(acc_ref[NUM_TENSORS + r:NUM_TENSORS + r + 1, :],
                         axis=1, keepdims=True)
            m1.append(s1 * inv_n)                  # (1, 1) E[x]
            m2.append(s2 * inv_n)                  # (1, 1) E[x^2]

        def pair_mean(ix, iy):
            # mean_{i,j} (1 + x_i - y_j)^2 via the moment identity.
            return (1.0 + m2[ix] + m2[iy]
                    + 2.0 * m1[ix] - 2.0 * m1[iy] - 2.0 * m1[ix] * m1[iy])

        # loss1 = single_loss(pred_pos, pred_neg) -> diff_matrix(neg, pos)
        loss1 = pair_mean(ROW_PRED_NEG, ROW_PRED_POS)
        # loss2 = constraint(pos_g_pos, neg_g_pos) + constraint(neg_g_neg, pos_g_neg)
        loss2 = (pair_mean(ROW_POS_G_POS, ROW_NEG_G_POS)
                 + pair_mean(ROW_NEG_G_NEG, ROW_POS_G_NEG))
        # loss3 = constraint(pos_g_neg, neg_g_neg) + constraint(neg_g_pos, pos_g_pos)
        loss3 = (pair_mean(ROW_POS_G_NEG, ROW_NEG_G_NEG)
                 + pair_mean(ROW_NEG_G_POS, ROW_POS_G_POS))

        out_ref[...] = lam_ref[0] * loss1 + lam_ref[1] * loss2 + lam_ref[2] * loss3


def loss_con3(y_pred_pos, y_pred_neg,
              y_pos_g_pos, y_pos_g_neg,
              y_neg_g_pos, y_neg_g_neg, lam, *, tile_rows=1024):
    """Pallas implementation of loss_con3.forward (all preds same numel)."""
    tensors = [y_pred_pos, y_pred_neg,
               y_pos_g_pos, y_pos_g_neg,
               y_neg_g_pos, y_neg_g_neg]
    n = int(tensors[0].size)
    if any(int(t.size) != n for t in tensors[1:]):
        # The reference tolerates ragged numels; this implementation assumes
        # all six prediction tensors share the same numel (the common case).
        raise ValueError("loss_con3: all prediction tensors must have the same numel")

    m = -(-n // LANES)                 # ceil(n / 128) rows
    pad = m * LANES - n
    views = []
    for t in tensors:
        flat = jnp.ravel(t)            # native dtype, no upcast copy
        if pad:
            # Only non-128-multiple numels pay one pad copy; masked in-kernel.
            flat = jnp.pad(flat, (0, pad))
        views.append(flat.reshape(m, LANES))

    # Tile rows: whole array if small, otherwise a multiple-of-8 row tile.
    if m <= tile_rows:
        tm = m
    else:
        tm = max(8, (tile_rows // 8) * 8)
    grid = (pl.cdiv(m, tm),)
    needs_mask = (m % tm != 0) or (m * LANES != n)

    lam_arr = jnp.asarray(lam, dtype=jnp.float32).reshape(3)
    kernel = functools.partial(_loss_con3_kernel,
                               n_true=n, tm=tm, needs_mask=needs_mask)

    data_spec = pl.BlockSpec((tm, LANES), lambda i: (i, 0))
    out = pl.pallas_call(
        kernel,
        out_shape=jax.ShapeDtypeStruct((1, 1), jnp.float32),
        grid=grid,
        in_specs=[pl.BlockSpec(memory_space=pltpu.MemorySpace.SMEM)]  # lam
                 + [data_spec] * NUM_TENSORS,
        out_specs=pl.BlockSpec((1, 1), lambda i: (0, 0)),
        scratch_shapes=[pltpu.VMEM((2 * NUM_TENSORS, LANES), jnp.float32)],
        compiler_params=pltpu.CompilerParams(
            dimension_semantics=("arbitrary",)),
    )(lam_arr, *views)
    return out[0, 0]


# ------------------------ pure-JAX reference -------------------------------
def _ref_pair_mean(x, y):
    x = jnp.ravel(x).astype(jnp.float32)
    y = jnp.ravel(y).astype(jnp.float32)
    d = 1.0 + x[:, None] - y[None, :]
    return jnp.mean(d * d)


def _ref_loss_con3(pp, pn, pgp, pgn, ngp, ngn, lam):
    lam = jnp.asarray(lam, jnp.float32)
    loss1 = _ref_pair_mean(pn, pp)
    loss2 = _ref_pair_mean(pgp, ngp) + _ref_pair_mean(ngn, pgn)
    loss3 = _ref_pair_mean(pgn, ngn) + _ref_pair_mean(ngp, pgp)
    return lam[0] * loss1 + lam[1] * loss2 + lam[2] * loss3


if __name__ == "__main__":
    base = jax.random.PRNGKey(0)
    lam = jnp.array([1.0, 0.5, 0.25], dtype=jnp.float32)

    # (shape, tile_rows): exercises single block, pad+mask, multi-step grid,
    # and multi-step grid with a masked out-of-bounds tail block.
    cases = [
        ((8, 16), 1024),    # N = 128 : single block, no masking
        ((17, 8), 1024),    # N = 136 : padded to 2x128, masked
        ((16, 128), 8),     # N = 2048: 2-step grid accumulation
        ((20, 128), 8),     # N = 2560: 3-step grid, masked OOB tail block
    ]

    for idx, (shape, tile_rows) in enumerate(cases):
        ks = jax.random.split(jax.random.fold_in(base, idx), 6)
        preds = [jax.random.normal(k, shape, jnp.float32) for k in ks]

        out = loss_con3(*preds, lam, tile_rows=tile_rows)
        out = jax.block_until_ready(out)

        ref = _ref_loss_con3(*preds, lam)
        ref = jax.block_until_ready(ref)

        assert jnp.allclose(out, ref, rtol=1e-5, atol=1e-5), (shape, out, ref)

    print("KERNEL_OK")
</pallas_src>

<mosaic_0001>
module attributes {stable_mosaic.version = 11 : i64} {
  func.func @_loss_con3_kernel(%arg0: i32, %arg1: memref<3xf32, #tpu.memory_space<smem>>, %arg2: memref<1x128xf32, #tpu.memory_space<vmem>>, %arg3: memref<1x128xf32, #tpu.memory_space<vmem>>, %arg4: memref<1x128xf32, #tpu.memory_space<vmem>>, %arg5: memref<1x128xf32, #tpu.memory_space<vmem>>, %arg6: memref<1x128xf32, #tpu.memory_space<vmem>>, %arg7: memref<1x128xf32, #tpu.memory_space<vmem>>, %arg8: memref<1x1xf32, #tpu.memory_space<vmem>>, %arg9: memref<12x128xf32, #tpu.memory_space<vmem>>) attributes {dimension_semantics = [#tpu.dimension_semantics<arbitrary>], iteration_bounds = array<i64: 1>, scalar_prefetch = 0 : i64, scratch_operands = 1 : i64, tpu.core_type = #tpu.core_type<tc>, window_params = [{transform_indices = @transform_0, window_bounds = array<i64: 3>}, {transform_indices = @transform_1, window_bounds = array<i64: 1, 128>}, {transform_indices = @transform_2, window_bounds = array<i64: 1, 128>}, {transform_indices = @transform_3, window_bounds = array<i64: 1, 128>}, {transform_indices = @transform_4, window_bounds = array<i64: 1, 128>}, {transform_indices = @transform_5, window_bounds = array<i64: 1, 128>}, {transform_indices = @transform_6, window_bounds = array<i64: 1, 128>}, {pipeline_mode = #tpu.pipeline_mode<synchronous>, transform_indices = @transform_7, window_bounds = array<i64: 1, 1>}]} {
    %c0_i32 = arith.constant 0 : i32
    %0 = arith.cmpi eq, %arg0, %c0_i32 : i32
    %1 = arith.extui %0 : i1 to i32
    %c0_i32_0 = arith.constant 0 : i32
    %2 = arith.cmpi ne, %1, %c0_i32_0 : i32
    scf.if %2 {
      %cst_62 = arith.constant 0.000000e+00 : f32
      %78 = vector.broadcast %cst_62 : f32 to vector<12x128xf32>
      %c0_63 = arith.constant 0 : index
      %c0_64 = arith.constant 0 : index
      %79 = vector.load %arg9[%c0_63, %c0_64] : memref<12x128xf32, #tpu.memory_space<vmem>>, vector<12x128xf32>
      tpu.vector_store %arg9[%c0_63, %c0_64], %78 {strides = array<i32>} : memref<12x128xf32, #tpu.memory_space<vmem>>, vector<12x128xf32>,
    } else {
    }
    %c0 = arith.constant 0 : index
    %c0_1 = arith.constant 0 : index
    %3 = vector.load %arg2[%c0, %c0_1] : memref<1x128xf32, #tpu.memory_space<vmem>>, vector<1x128xf32>
    %c0_2 = arith.constant 0 : index
    %c0_3 = arith.constant 0 : index
    %4 = vector.load %arg9[%c0_2, %c0_3] : memref<12x128xf32, #tpu.memory_space<vmem>>, vector<1x128xf32>
    %cst = arith.constant dense<0.000000e+00> : vector<128xf32>
    %5 = vector.multi_reduction <add>, %3, %cst [0] : vector<1x128xf32> to vector<128xf32>
    %6 = vector.shape_cast %5 : vector<128xf32> to vector<1x128xf32>
    %7 = arith.addf %4, %6 : vector<1x128xf32>
    %c0_4 = arith.constant 0 : index
    %c0_5 = arith.constant 0 : index
    %8 = vector.load %arg9[%c0_4, %c0_5] : memref<12x128xf32, #tpu.memory_space<vmem>>, vector<1x128xf32>
    tpu.vector_store %arg9[%c0_4, %c0_5], %7 {strides = array<i32>} : memref<12x128xf32, #tpu.memory_space<vmem>>, vector<1x128xf32>,
    %c6 = arith.constant 6 : index
    %c0_6 = arith.constant 0 : index
    %9 = vector.load %arg9[%c6, %c0_6] : memref<12x128xf32, #tpu.memory_space<vmem>>, vector<1x128xf32>
    %10 = arith.mulf %3, %3 : vector<1x128xf32>
    %cst_7 = arith.constant dense<0.000000e+00> : vector<128xf32>
    %11 = vector.multi_reduction <add>, %10, %cst_7 [0] : vector<1x128xf32> to vector<128xf32>
    %12 = vector.shape_cast %11 : vector<128xf32> to vector<1x128xf32>
    %13 = arith.addf %9, %12 : vector<1x128xf32>
    %c6_8 = arith.constant 6 : index
    %c0_9 = arith.constant 0 : index
    %14 = vector.load %arg9[%c6_8, %c0_9] : memref<12x128xf32, #tpu.memory_space<vmem>>, vector<1x128xf32>
    tpu.vector_store %arg9[%c6_8, %c0_9], %13 {strides = array<i32>} : memref<12x128xf32, #tpu.memory_space<vmem>>, vector<1x128xf32>,
    %c0_10 = arith.constant 0 : index
    %c0_11 = arith.constant 0 : index
    %15 = vector.load %arg3[%c0_10, %c0_11] : memref<1x128xf32, #tpu.memory_space<vmem>>, vector<1x128xf32>
    %c1 = arith.constant 1 : index
    %c0_12 = arith.constant 0 : index
    %16 = vector.load %arg9[%c1, %c0_12] : memref<12x128xf32, #tpu.memory_space<vmem>>, vector<1x128xf32>
    %cst_13 = arith.constant dense<0.000000e+00> : vector<128xf32>
    %17 = vector.multi_reduction <add>, %15, %cst_13 [0] : vector<1x128xf32> to vector<128xf32>
    %18 = vector.shape_cast %17 : vector<128xf32> to vector<1x128xf32>
    %19 = arith.addf %16, %18 : vector<1x128xf32>
    %c1_14 = arith.constant 1 : index
    %c0_15 = arith.constant 0 : index
    %20 = vector.load %arg9[%c1_14, %c0_15] : memref<12x128xf32, #tpu.memory_space<vmem>>, vector<1x128xf32>
    tpu.vector_store %arg9[%c1_14, %c0_15], %19 {strides = array<i32>} : memref<12x128xf32, #tpu.memory_space<vmem>>, vector<1x128xf32>,
    %c7 = arith.constant 7 : index
    %c0_16 = arith.constant 0 : index
    %21 = vector.load %arg9[%c7, %c0_16] : memref<12x128xf32, #tpu.memory_space<vmem>>, vector<1x128xf32>
    %22 = arith.mulf %15, %15 : vector<1x128xf32>
    %cst_17 = arith.constant dense<0.000000e+00> : vector<128xf32>
    %23 = vector.multi_reduction <add>, %22, %cst_17 [0] : vector<1x128xf32> to vector<128xf32>
    %24 = vector.shape_cast %23 : vector<128xf32> to vector<1x128xf32>
    %25 = arith.addf %21, %24 : vector<1x128xf32>
    %c7_18 = arith.constant 7 : index
    %c0_19 = arith.constant 0 : index
    %26 = vector.load %arg9[%c7_18, %c0_19] : memref<12x128xf32, #tpu.memory_space<vmem>>, vector<1x128xf32>
    tpu.vector_store %arg9[%c7_18, %c0_19], %25 {strides = array<i32>} : memref<12x128xf32, #tpu.memory_space<vmem>>, vector<1x128xf32>,
    %c0_20 = arith.constant 0 : index
    %c0_21 = arith.constant 0 : index
    %27 = vector.load %arg4[%c0_20, %c0_21] : memref<1x128xf32, #tpu.memory_space<vmem>>, vector<1x128xf32>
    %c2 = arith.constant 2 : index
    %c0_22 = arith.constant 0 : index
    %28 = vector.load %arg9[%c2, %c0_22] : memref<12x128xf32, #tpu.memory_space<vmem>>, vector<1x128xf32>
    %cst_23 = arith.constant dense<0.000000e+00> : vector<128xf32>
    %29 = vector.multi_reduction <add>, %27, %cst_23 [0] : vector<1x128xf32> to vector<128xf32>
    %30 = vector.shape_cast %29 : vector<128xf32> to vector<1x128xf32>
    %31 = arith.addf %28, %30 : vector<1x128xf32>
    %c2_24 = arith.constant 2 : index
    %c0_25 = arith.constant 0 : index
    %32 = vector.load %arg9[%c2_24, %c0_25] : memref<12x128xf32, #tpu.memory_space<vmem>>, vector<1x128xf32>
    tpu.vector_store %arg9[%c2_24, %c0_25], %31 {strides = array<i32>} : memref<12x128xf32, #tpu.memory_space<vmem>>, vector<1x128xf32>,
    %c8 = arith.constant 8 : index
    %c0_26 = arith.constant 0 : index
    %33 = vector.load %arg9[%c8, %c0_26] : memref<12x128xf32, #tpu.memory_space<vmem>>, vector<1x128xf32>
    %34 = arith.mulf %27, %27 : vector<1x128xf32>
    %cst_27 = arith.constant dense<0.000000e+00> : vector<128xf32>
    %35 = vector.multi_reduction <add>, %34, %cst_27 [0] : vector<1x128xf32> to vector<128xf32>
    %36 = vector.shape_cast %35 : vector<128xf32> to vector<1x128xf32>
    %37 = arith.addf %33, %36 : vector<1x128xf32>
    %c8_28 = arith.constant 8 : index
    %c0_29 = arith.constant 0 : index
    %38 = vector.load %arg9[%c8_28, %c0_29] : memref<12x128xf32, #tpu.memory_space<vmem>>, vector<1x128xf32>
    tpu.vector_store %arg9[%c8_28, %c0_29], %37 {strides = array<i32>} : memref<12x128xf32, #tpu.memory_space<vmem>>, vector<1x128xf32>,
    %c0_30 = arith.constant 0 : index
    %c0_31 = arith.constant 0 : index
    %39 = vector.load %arg5[%c0_30, %c0_31] : memref<1x128xf32, #tpu.memory_space<vmem>>, vector<1x128xf32>
    %c3 = arith.constant 3 : index
    %c0_32 = arith.constant 0 : index
    %40 = vector.load %arg9[%c3, %c0_32] : memref<12x128xf32, #tpu.memory_space<vmem>>, vector<1x128xf32>
    %cst_33 = arith.constant dense<0.000000e+00> : vector<128xf32>
    %41 = vector.multi_reduction <add>, %39, %cst_33 [0] : vector<1x128xf32> to vector<128xf32>
    %42 = vector.shape_cast %41 : vector<128xf32> to vector<1x128xf32>
    %43 = arith.addf %40, %42 : vector<1x128xf32>
    %c3_34 = arith.constant 3 : index
    %c0_35 = arith.constant 0 : index
    %44 = vector.load %arg9[%c3_34, %c0_35] : memref<12x128xf32, #tpu.memory_space<vmem>>, vector<1x128xf32>
    tpu.vector_store %arg9[%c3_34, %c0_35], %43 {strides = array<i32>} : memref<12x128xf32, #tpu.memory_space<vmem>>, vector<1x128xf32>,
    %c9 = arith.constant 9 : index
    %c0_36 = arith.constant 0 : index
    %45 = vector.load %arg9[%c9, %c0_36] : memref<12x128xf32, #tpu.memory_space<vmem>>, vector<1x128xf32>
    %46 = arith.mulf %39, %39 : vector<1x128xf32>
    %cst_37 = arith.constant dense<0.000000e+00> : vector<128xf32>
    %47 = vector.multi_reduction <add>, %46, %cst_37 [0] : vector<1x128xf32> to vector<128xf32>
    %48 = vector.shape_cast %47 : vector<128xf32> to vector<1x128xf32>
    %49 = arith.addf %45, %48 : vector<1x128xf32>
    %c9_38 = arith.constant 9 : index
    %c0_39 = arith.constant 0 : index
    %50 = vector.load %arg9[%c9_38, %c0_39] : memref<12x128xf32, #tpu.memory_space<vmem>>, vector<1x128xf32>
    tpu.vector_store %arg9[%c9_38, %c0_39], %49 {strides = array<i32>} : memref<12x128xf32, #tpu.memory_space<vmem>>, vector<1x128xf32>,
    %c0_40 = arith.constant 0 : index
    %c0_41 = arith.constant 0 : index
    %51 = vector.load %arg6[%c0_40, %c0_41] : memref<1x128xf32, #tpu.memory_space<vmem>>, vector<1x128xf32>
    %c4 = arith.constant 4 : index
    %c0_42 = arith.constant 0 : index
    %52 = vector.load %arg9[%c4, %c0_42] : memref<12x128xf32, #tpu.memory_space<vmem>>, vector<1x128xf32>
    %cst_43 = arith.constant dense<0.000000e+00> : vector<128xf32>
    %53 = vector.multi_reduction <add>, %51, %cst_43 [0] : vector<1x128xf32> to vector<128xf32>
    %54 = vector.shape_cast %53 : vector<128xf32> to vector<1x128xf32>
    %55 = arith.addf %52, %54 : vector<1x128xf32>
    %c4_44 = arith.constant 4 : index
    %c0_45 = arith.constant 0 : index
    %56 = vector.load %arg9[%c4_44, %c0_45] : memref<12x128xf32, #tpu.memory_space<vmem>>, vector<1x128xf32>
    tpu.vector_store %arg9[%c4_44, %c0_45], %55 {strides = array<i32>} : memref<12x128xf32, #tpu.memory_space<vmem>>, vector<1x128xf32>,
    %c10 = arith.constant 10 : index
    %c0_46 = arith.constant 0 : index
    %57 = vector.load %arg9[%c10, %c0_46] : memref<12x128xf32, #tpu.memory_space<vmem>>, vector<1x128xf32>
    %58 = arith.mulf %51, %51 : vector<1x128xf32>
    %cst_47 = arith.constant dense<0.000000e+00> : vector<128xf32>
    %59 = vector.multi_reduction <add>, %58, %cst_47 [0] : vector<1x128xf32> to vector<128xf32>
    %60 = vector.shape_cast %59 : vector<128xf32> to vector<1x128xf32>
    %61 = arith.addf %57, %60 : vector<1x128xf32>
    %c10_48 = arith.constant 10 : index
    %c0_49 = arith.constant 0 : index
    %62 = vector.load %arg9[%c10_48, %c0_49] : memref<12x128xf32, #tpu.memory_space<vmem>>, vector<1x128xf32>
    tpu.vector_store %arg9[%c10_48, %c0_49], %61 {strides = array<i32>} : memref<12x128xf32, #tpu.memory_space<vmem>>, vector<1x128xf32>,
    %c0_50 = arith.constant 0 : index
    %c0_51 = arith.constant 0 : index
    %63 = vector.load %arg7[%c0_50, %c0_51] : memref<1x128xf32, #tpu.memory_space<vmem>>, vector<1x128xf32>
    %c5 = arith.constant 5 : index
    %c0_52 = arith.constant 0 : index
    %64 = vector.load %arg9[%c5, %c0_52] : memref<12x128xf32, #tpu.memory_space<vmem>>, vector<1x128xf32>
    %cst_53 = arith.constant dense<0.000000e+00> : vector<128xf32>
    %65 = vector.multi_reduction <add>, %63, %cst_53 [0] : vector<1x128xf32> to vector<128xf32>
    %66 = vector.shape_cast %65 : vector<128xf32> to vector<1x128xf32>
    %67 = arith.addf %64, %66 : vector<1x128xf32>
    %c5_54 = arith.constant 5 : index
    %c0_55 = arith.constant 0 : index
    %68 = vector.load %arg9[%c5_54, %c0_55] : memref<12x128xf32, #tpu.memory_space<vmem>>, vector<1x128xf32>
    tpu.vector_store %arg9[%c5_54, %c0_55], %67 {strides = array<i32>} : memref<12x128xf32, #tpu.memory_space<vmem>>, vector<1x128xf32>,
    %c11 = arith.constant 11 : index
    %c0_56 = arith.constant 0 : index
    %69 = vector.load %arg9[%c11, %c0_56] : memref<12x128xf32, #tpu.memory_space<vmem>>, vector<1x128xf32>
    %70 = arith.mulf %63, %63 : vector<1x128xf32>
    %cst_57 = arith.constant dense<0.000000e+00> : vector<128xf32>
    %71 = vector.multi_reduction <add>, %70, %cst_57 [0] : vector<1x128xf32> to vector<128xf32>
    %72 = vector.shape_cast %71 : vector<128xf32> to vector<1x128xf32>
    %73 = arith.addf %69, %72 : vector<1x128xf32>
    %c11_58 = arith.constant 11 : index
    %c0_59 = arith.constant 0 : index
    %74 = vector.load %arg9[%c11_58, %c0_59] : memref<12x128xf32, #tpu.memory_space<vmem>>, vector<1x128xf32>
    tpu.vector_store %arg9[%c11_58, %c0_59], %73 {strides = array<i32>} : memref<12x128xf32, #tpu.memory_space<vmem>>, vector<1x128xf32>,
    %c0_i32_60 = arith.constant 0 : i32
    %75 = arith.cmpi eq, %arg0, %c0_i32_60 : i32
    %76 = arith.extui %75 : i1 to i32
    %c0_i32_61 = arith.constant 0 : i32
    %77 = arith.cmpi ne, %76, %c0_i32_61 : i32
    scf.if %77 {
      %c0_62 = arith.constant 0 : index
      %c0_63 = arith.constant 0 : index
      %78 = vector.load %arg9[%c0_62, %c0_63] : memref<12x128xf32, #tpu.memory_space<vmem>>, vector<1x128xf32>
      %cst_64 = arith.constant dense<0.000000e+00> : vector<1xf32>
      %79 = vector.multi_reduction <add>, %78, %cst_64 [1] : vector<1x128xf32> to vector<1xf32>
      %80 = vector.shape_cast %79 : vector<1xf32> to vector<1x1xf32>
      %c6_65 = arith.constant 6 : index
      %c0_66 = arith.constant 0 : index
      %81 = vector.load %arg9[%c6_65, %c0_66] : memref<12x128xf32, #tpu.memory_space<vmem>>, vector<1x128xf32>
      %cst_67 = arith.constant dense<0.000000e+00> : vector<1xf32>
      %82 = vector.multi_reduction <add>, %81, %cst_67 [1] : vector<1x128xf32> to vector<1xf32>
      %83 = vector.shape_cast %82 : vector<1xf32> to vector<1x1xf32>
      %cst_68 = arith.constant 7.812500e-03 : f32
      %84 = vector.broadcast %cst_68 : f32 to vector<1x1xf32>
      %85 = arith.mulf %80, %84 : vector<1x1xf32>
      %cst_69 = arith.constant 7.812500e-03 : f32
      %86 = vector.broadcast %cst_69 : f32 to vector<1x1xf32>
      %87 = arith.mulf %83, %86 : vector<1x1xf32>
      %c1_70 = arith.constant 1 : index
      %c0_71 = arith.constant 0 : index
      %88 = vector.load %arg9[%c1_70, %c0_71] : memref<12x128xf32, #tpu.memory_space<vmem>>, vector<1x128xf32>
      %cst_72 = arith.constant dense<0.000000e+00> : vector<1xf32>
      %89 = vector.multi_reduction <add>, %88, %cst_72 [1] : vector<1x128xf32> to vector<1xf32>
      %90 = vector.shape_cast %89 : vector<1xf32> to vector<1x1xf32>
      %c7_73 = arith.constant 7 : index
      %c0_74 = arith.constant 0 : index
      %91 = vector.load %arg9[%c7_73, %c0_74] : memref<12x128xf32, #tpu.memory_space<vmem>>, vector<1x128xf32>
      %cst_75 = arith.constant dense<0.000000e+00> : vector<1xf32>
      %92 = vector.multi_reduction <add>, %91, %cst_75 [1] : vector<1x128xf32> to vector<1xf32>
      %93 = vector.shape_cast %92 : vector<1xf32> to vector<1x1xf32>
      %cst_76 = arith.constant 7.812500e-03 : f32
      %94 = vector.broadcast %cst_76 : f32 to vector<1x1xf32>
      %95 = arith.mulf %90, %94 : vector<1x1xf32>
      %cst_77 = arith.constant 7.812500e-03 : f32
      %96 = vector.broadcast %cst_77 : f32 to vector<1x1xf32>
      %97 = arith.mulf %93, %96 : vector<1x1xf32>
      %c2_78 = arith.constant 2 : index
      %c0_79 = arith.constant 0 : index
      %98 = vector.load %arg9[%c2_78, %c0_79] : memref<12x128xf32, #tpu.memory_space<vmem>>, vector<1x128xf32>
      %cst_80 = arith.constant dense<0.000000e+00> : vector<1xf32>
      %99 = vector.multi_reduction <add>, %98, %cst_80 [1] : vector<1x128xf32> to vector<1xf32>
      %100 = vector.shape_cast %99 : vector<1xf32> to vector<1x1xf32>
      %c8_81 = arith.constant 8 : index
      %c0_82 = arith.constant 0 : index
      %101 = vector.load %arg9[%c8_81, %c0_82] : memref<12x128xf32, #tpu.memory_space<vmem>>, vector<1x128xf32>
      %cst_83 = arith.constant dense<0.000000e+00> : vector<1xf32>
      %102 = vector.multi_reduction <add>, %101, %cst_83 [1] : vector<1x128xf32> to vector<1xf32>
      %103 = vector.shape_cast %102 : vector<1xf32> to vector<1x1xf32>
      %cst_84 = arith.constant 7.812500e-03 : f32
      %104 = vector.broadcast %cst_84 : f32 to vector<1x1xf32>
      %105 = arith.mulf %100, %104 : vector<1x1xf32>
      %cst_85 = arith.constant 7.812500e-03 : f32
      %106 = vector.broadcast %cst_85 : f32 to vector<1x1xf32>
      %107 = arith.mulf %103, %106 : vector<1x1xf32>
      %c3_86 = arith.constant 3 : index
      %c0_87 = arith.constant 0 : index
      %108 = vector.load %arg9[%c3_86, %c0_87] : memref<12x128xf32, #tpu.memory_space<vmem>>, vector<1x128xf32>
      %cst_88 = arith.constant dense<0.000000e+00> : vector<1xf32>
      %109 = vector.multi_reduction <add>, %108, %cst_88 [1] : vector<1x128xf32> to vector<1xf32>
      %110 = vector.shape_cast %109 : vector<1xf32> to vector<1x1xf32>
      %c9_89 = arith.constant 9 : index
      %c0_90 = arith.constant 0 : index
      %111 = vector.load %arg9[%c9_89, %c0_90] : memref<12x128xf32, #tpu.memory_space<vmem>>, vector<1x128xf32>
      %cst_91 = arith.constant dense<0.000000e+00> : vector<1xf32>
      %112 = vector.multi_reduction <add>, %111, %cst_91 [1] : vector<1x128xf32> to vector<1xf32>
      %113 = vector.shape_cast %112 : vector<1xf32> to vector<1x1xf32>
      %cst_92 = arith.constant 7.812500e-03 : f32
      %114 = vector.broadcast %cst_92 : f32 to vector<1x1xf32>
      %115 = arith.mulf %110, %114 : vector<1x1xf32>
      %cst_93 = arith.constant 7.812500e-03 : f32
      %116 = vector.broadcast %cst_93 : f32 to vector<1x1xf32>
      %117 = arith.mulf %113, %116 : vector<1x1xf32>
      %c4_94 = arith.constant 4 : index
      %c0_95 = arith.constant 0 : index
      %118 = vector.load %arg9[%c4_94, %c0_95] : memref<12x128xf32, #tpu.memory_space<vmem>>, vector<1x128xf32>
      %cst_96 = arith.constant dense<0.000000e+00> : vector<1xf32>
      %119 = vector.multi_reduction <add>, %118, %cst_96 [1] : vector<1x128xf32> to vector<1xf32>
      %120 = vector.shape_cast %119 : vector<1xf32> to vector<1x1xf32>
      %c10_97 = arith.constant 10 : index
      %c0_98 = arith.constant 0 : index
      %121 = vector.load %arg9[%c10_97, %c0_98] : memref<12x128xf32, #tpu.memory_space<vmem>>, vector<1x128xf32>
      %cst_99 = arith.constant dense<0.000000e+00> : vector<1xf32>
      %122 = vector.multi_reduction <add>, %121, %cst_99 [1] : vector<1x128xf32> to vector<1xf32>
      %123 = vector.shape_cast %122 : vector<1xf32> to vector<1x1xf32>
      %cst_100 = arith.constant 7.812500e-03 : f32
      %124 = vector.broadcast %cst_100 : f32 to vector<1x1xf32>
      %125 = arith.mulf %120, %124 : vector<1x1xf32>
      %cst_101 = arith.constant 7.812500e-03 : f32
      %126 = vector.broadcast %cst_101 : f32 to vector<1x1xf32>
      %127 = arith.mulf %123, %126 : vector<1x1xf32>
      %c5_102 = arith.constant 5 : index
      %c0_103 = arith.constant 0 : index
      %128 = vector.load %arg9[%c5_102, %c0_103] : memref<12x128xf32, #tpu.memory_space<vmem>>, vector<1x128xf32>
      %cst_104 = arith.constant dense<0.000000e+00> : vector<1xf32>
      %129 = vector.multi_reduction <add>, %128, %cst_104 [1] : vector<1x128xf32> to vector<1xf32>
      %130 = vector.shape_cast %129 : vector<1xf32> to vector<1x1xf32>
      %c11_105 = arith.constant 11 : index
      %c0_106 = arith.constant 0 : index
      %131 = vector.load %arg9[%c11_105, %c0_106] : memref<12x128xf32, #tpu.memory_space<vmem>>, vector<1x128xf32>
      %cst_107 = arith.constant dense<0.000000e+00> : vector<1xf32>
      %132 = vector.multi_reduction <add>, %131, %cst_107 [1] : vector<1x128xf32> to vector<1xf32>
      %133 = vector.shape_cast %132 : vector<1xf32> to vector<1x1xf32>
      %cst_108 = arith.constant 7.812500e-03 : f32
      %134 = vector.broadcast %cst_108 : f32 to vector<1x1xf32>
      %135 = arith.mulf %130, %134 : vector<1x1xf32>
      %cst_109 = arith.constant 7.812500e-03 : f32
      %136 = vector.broadcast %cst_109 : f32 to vector<1x1xf32>
      %137 = arith.mulf %133, %136 : vector<1x1xf32>
      %cst_110 = arith.constant 1.000000e+00 : f32
      %138 = vector.broadcast %cst_110 : f32 to vector<1x1xf32>
      %139 = arith.addf %138, %97 : vector<1x1xf32>
      %140 = arith.addf %139, %87 : vector<1x1xf32>
      %cst_111 = arith.constant 2.000000e+00 : f32
      %141 = vector.broadcast %cst_111 : f32 to vector<1x1xf32>
      %142 = arith.mulf %141, %95 : vector<1x1xf32>
      %143 = arith.addf %140, %142 : vector<1x1xf32>
      %cst_112 = arith.constant 2.000000e+00 : f32
      %144 = vector.broadcast %cst_112 : f32 to vector<1x1xf32>
      %145 = arith.mulf %144, %85 : vector<1x1xf32>
      %146 = arith.subf %143, %145 : vector<1x1xf32>
      %cst_113 = arith.constant 2.000000e+00 : f32
      %147 = vector.broadcast %cst_113 : f32 to vector<1x1xf32>
      %148 = arith.mulf %147, %95 : vector<1x1xf32>
      %149 = arith.mulf %148, %85 : vector<1x1xf32>
      %150 = arith.subf %146, %149 : vector<1x1xf32>
      %cst_114 = arith.constant 1.000000e+00 : f32
      %151 = vector.broadcast %cst_114 : f32 to vector<1x1xf32>
      %152 = arith.addf %151, %107 : vector<1x1xf32>
      %153 = arith.addf %152, %127 : vector<1x1xf32>
      %cst_115 = arith.constant 2.000000e+00 : f32
      %154 = vector.broadcast %cst_115 : f32 to vector<1x1xf32>
      %155 = arith.mulf %154, %105 : vector<1x1xf32>
      %156 = arith.addf %153, %155 : vector<1x1xf32>
      %cst_116 = arith.constant 2.000000e+00 : f32
      %157 = vector.broadcast %cst_116 : f32 to vector<1x1xf32>
      %158 = arith.mulf %157, %125 : vector<1x1xf32>
      %159 = arith.subf %156, %158 : vector<1x1xf32>
      %cst_117 = arith.constant 2.000000e+00 : f32
      %160 = vector.broadcast %cst_117 : f32 to vector<1x1xf32>
      %161 = arith.mulf %160, %105 : vector<1x1xf32>
      %162 = arith.mulf %161, %125 : vector<1x1xf32>
      %163 = arith.subf %159, %162 : vector<1x1xf32>
      %cst_118 = arith.constant 1.000000e+00 : f32
      %164 = vector.broadcast %cst_118 : f32 to vector<1x1xf32>
      %165 = arith.addf %164, %137 : vector<1x1xf32>
      %166 = arith.addf %165, %117 : vector<1x1xf32>
      %cst_119 = arith.constant 2.000000e+00 : f32
      %167 = vector.broadcast %cst_119 : f32 to vector<1x1xf32>
      %168 = arith.mulf %167, %135 : vector<1x1xf32>
      %169 = arith.addf %166, %168 : vector<1x1xf32>
      %cst_120 = arith.constant 2.000000e+00 : f32
      %170 = vector.broadcast %cst_120 : f32 to vector<1x1xf32>
      %171 = arith.mulf %170, %115 : vector<1x1xf32>
      %172 = arith.subf %169, %171 : vector<1x1xf32>
      %cst_121 = arith.constant 2.000000e+00 : f32
      %173 = vector.broadcast %cst_121 : f32 to vector<1x1xf32>
      %174 = arith.mulf %173, %135 : vector<1x1xf32>
      %175 = arith.mulf %174, %115 : vector<1x1xf32>
      %176 = arith.subf %172, %175 : vector<1x1xf32>
      %177 = arith.addf %163, %176 : vector<1x1xf32>
      %cst_122 = arith.constant 1.000000e+00 : f32
      %178 = vector.broadcast %cst_122 : f32 to vector<1x1xf32>
      %179 = arith.addf %178, %117 : vector<1x1xf32>
      %180 = arith.addf %179, %137 : vector<1x1xf32>
      %cst_123 = arith.constant 2.000000e+00 : f32
      %181 = vector.broadcast %cst_123 : f32 to vector<1x1xf32>
      %182 = arith.mulf %181, %115 : vector<1x1xf32>
      %183 = arith.addf %180, %182 : vector<1x1xf32>
      %cst_124 = arith.constant 2.000000e+00 : f32
      %184 = vector.broadcast %cst_124 : f32 to vector<1x1xf32>
      %185 = arith.mulf %184, %135 : vector<1x1xf32>
      %186 = arith.subf %183, %185 : vector<1x1xf32>
      %cst_125 = arith.constant 2.000000e+00 : f32
      %187 = vector.broadcast %cst_125 : f32 to vector<1x1xf32>
      %188 = arith.mulf %187, %115 : vector<1x1xf32>
      %189 = arith.mulf %188, %135 : vector<1x1xf32>
      %190 = arith.subf %186, %189 : vector<1x1xf32>
      %cst_126 = arith.constant 1.000000e+00 : f32
      %191 = vector.broadcast %cst_126 : f32 to vector<1x1xf32>
      %192 = arith.addf %191, %127 : vector<1x1xf32>
      %193 = arith.addf %192, %107 : vector<1x1xf32>
      %cst_127 = arith.constant 2.000000e+00 : f32
      %194 = vector.broadcast %cst_127 : f32 to vector<1x1xf32>
      %195 = arith.mulf %194, %125 : vector<1x1xf32>
      %196 = arith.addf %193, %195 : vector<1x1xf32>
      %cst_128 = arith.constant 2.000000e+00 : f32
      %197 = vector.broadcast %cst_128 : f32 to vector<1x1xf32>
      %198 = arith.mulf %197, %105 : vector<1x1xf32>
      %199 = arith.subf %196, %198 : vector<1x1xf32>
      %cst_129 = arith.constant 2.000000e+00 : f32
      %200 = vector.broadcast %cst_129 : f32 to vector<1x1xf32>
      %201 = arith.mulf %200, %125 : vector<1x1xf32>
      %202 = arith.mulf %201, %105 : vector<1x1xf32>
      %203 = arith.subf %199, %202 : vector<1x1xf32>
      %204 = arith.addf %190, %203 : vector<1x1xf32>
      %c0_130 = arith.constant 0 : index
      %205 = memref.load %arg1[%c0_130] : memref<3xf32, #tpu.memory_space<smem>>
      %206 = vector.broadcast %205 : f32 to vector<1x1xf32>
      %207 = arith.mulf %206, %150 : vector<1x1xf32>
      %c1_131 = arith.constant 1 : index
      %208 = memref.load %arg1[%c1_131] : memref<3xf32, #tpu.memory_space<smem>>
      %209 = vector.broadcast %208 : f32 to vector<1x1xf32>
      %210 = arith.mulf %209, %177 : vector<1x1xf32>
      %211 = arith.addf %207, %210 : vector<1x1xf32>
      %c2_132 = arith.constant 2 : index
      %212 = memref.load %arg1[%c2_132] : memref<3xf32, #tpu.memory_space<smem>>
      %213 = vector.broadcast %212 : f32 to vector<1x1xf32>
      %214 = arith.mulf %213, %204 : vector<1x1xf32>
      %215 = arith.addf %211, %214 : vector<1x1xf32>
      %c0_133 = arith.constant 0 : index
      %c0_134 = arith.constant 0 : index
      %216 = vector.load %arg8[%c0_133, %c0_134] : memref<1x1xf32, #tpu.memory_space<vmem>>, vector<1x1xf32>
      tpu.vector_store %arg8[%c0_133, %c0_134], %215 {strides = array<i32>} : memref<1x1xf32, #tpu.memory_space<vmem>>, vector<1x1xf32>,
    } else {
    }
    return
  }
  func.func @transform_0(%arg0: i32) -> i32 {
    %c0_i32 = arith.constant 0 : i32
    %c0_i32_0 = arith.constant 0 : i32
    return %c0_i32 : i32
  }
  func.func @transform_1(%arg0: i32) -> (i32, i32) {
    %c0_i32 = arith.constant 0 : i32
    %c0_i32_0 = arith.constant 0 : i32
    return %arg0, %c0_i32 : i32, i32
  }
  func.func @transform_2(%arg0: i32) -> (i32, i32) {
    %c0_i32 = arith.constant 0 : i32
    %c0_i32_0 = arith.constant 0 : i32
    return %arg0, %c0_i32 : i32, i32
  }
  func.func @transform_3(%arg0: i32) -> (i32, i32) {
    %c0_i32 = arith.constant 0 : i32
    %c0_i32_0 = arith.constant 0 : i32
    return %arg0, %c0_i32 : i32, i32
  }
  func.func @transform_4(%arg0: i32) -> (i32, i32) {
    %c0_i32 = arith.constant 0 : i32
    %c0_i32_0 = arith.constant 0 : i32
    return %arg0, %c0_i32 : i32, i32
  }
  func.func @transform_5(%arg0: i32) -> (i32, i32) {
    %c0_i32 = arith.constant 0 : i32
    %c0_i32_0 = arith.constant 0 : i32
    return %arg0, %c0_i32 : i32, i32
  }
  func.func @transform_6(%arg0: i32) -> (i32, i32) {
    %c0_i32 = arith.constant 0 : i32
    %c0_i32_0 = arith.constant 0 : i32
    return %arg0, %c0_i32 : i32, i32
  }
  func.func @transform_7(%arg0: i32) -> (i32, i32) {
    %c0_i32 = arith.constant 0 : i32
    %c0_i32_0 = arith.constant 0 : i32
    %c0_i32_1 = arith.constant 0 : i32
    return %c0_i32, %c0_i32_0 : i32, i32
  }
}

</mosaic_0001>

<llo_original>
// kernel: tpu_custom_call.1
$region0: #{tpu_custom_call.1}
  #allocation0 [shape = 'u32[]', space=smem, size = 0x4, offset = 0x4, fixed_abs, tag = 'smem constant byte address 0x4 - core index']
  #allocation1 [shape = 'u32[72,128]{1,0:T(1,128)}', space=vmem, size = 0x9000, scoped, tag = 'internal scratch']
  #allocation2 [shape = 'f32[12,128]{1,0:T(8,128)}', space=vmem, size = 0x2000, scoped, tag = 'scratch operand']
  %s0 = inlined_call_operand.hbm [shape: f32[3], index: 0, kind: input, shape index: {}]
  %s1 = inlined_call_operand.hbm [shape: f32[1,128], index: 1, kind: input, shape index: {}]
  %s2 = inlined_call_operand.vmem [shape: f32[1,128], index: 2, kind: input, shape index: {}]
  %s3 = inlined_call_operand.vmem [shape: f32[1,128], index: 3, kind: input, shape index: {}]
  %s4 = inlined_call_operand.vmem [shape: f32[1,128], index: 4, kind: input, shape index: {}]
  %s5 = inlined_call_operand.vmem [shape: f32[1,128], index: 5, kind: input, shape index: {}]
  %s6 = inlined_call_operand.vmem [shape: f32[1,128], index: 6, kind: input, shape index: {}]
  %s7 = inlined_call_operand.hbm [shape: f32[1,1], index: 7, kind: output, shape index: {}]
  %s8 = sld [smem:[#allocation0]]
  $region54: #{tpu_custom_call.1} parent=0
    _
  %s10 = ssub.s32 1, %s8
  %s11 = scalar_select 0, %s10, %s8
  $region1: #{tpu_custom_call.1} parent=0
    #allocation3 [shape = 'u8[512]{0}', space=smem, size = 0x200, scoped, tag = 'input window, operand 0, single buffered']
    #allocation4 [shape = 's32[1]{0}', space=sflag, size = 0x4, scoped, tag = 'scoped memory for tpu_custom_call.1']
    #allocation5 [shape = 's32[1]{0}', space=sflag, size = 0x4, scoped, tag = 'scoped memory for tpu_custom_call.1']
    #allocation6 [shape = 's32[1]{0}', space=sflag, size = 0x4, scoped, tag = 'scoped memory for tpu_custom_call.1']
    #allocation7 [shape = 'u8[512]{0}', space=vmem, size = 0x400, scoped, tag = 'input window, operand 1, single buffered']
    #allocation8 [shape = 'u8[512]{0}', space=vmem, size = 0x400, scoped, tag = 'output window, operand 0, single buffered']
    %12 = vsyncpa [#allocation6], 0
    %13 = vsyncpa [#allocation4], 0
    %14 = vsyncpa [#allocation5], 0
    // Predicated region
    $region2: #{tpu_custom_call.1} parent=1 // pred_check
      _
    $region3: #{tpu_custom_call.1} parent=1 // pred_check_branch
      %16 = sbr.rel (0) target = $region5
    $region4: #{tpu_custom_call.1} parent=1 // pred_region
      %18 = vsyncadd [#allocation6], 0
      %s20 = sshll.u32 %s0, 4
      %s21 = int_to_ptr.hbm [resolvable:$true] %s20
      %23 = dma.hbm_to_smem %s21, 16, [#allocation3], [#allocation6]
    $region5: #{tpu_custom_call.1} parent=1 // pred_fallthru
      _
    // Predicated region
    $region6: #{tpu_custom_call.1} parent=1 // pred_check
      _
    $region7: #{tpu_custom_call.1} parent=1 // pred_check_branch
      %25 = sbr.rel (0) target = $region9
    $region8: #{tpu_custom_call.1} parent=1 // pred_region
      %27 = vsyncadd [#allocation4], 0
      %s29 = sshll.u32 %s1, 4
      %s30 = int_to_ptr.hbm [resolvable:$true] %s29
      %s31 = sshll.u32 [#allocation7], 4
      %s32 = int_to_ptr.vmem [resolvable:$true] %s31
      %34 = dma.hbm_to_vmem [thread:$0]  %s30, 16, %s32, [#allocation4]
    $region9: #{tpu_custom_call.1} parent=1 // pred_fallthru
      _
    // Predicated region
    $region10: #{tpu_custom_call.1} parent=1 // pred_check
      _
    $region11: #{tpu_custom_call.1} parent=1 // pred_check_branch
      %36 = sbr.rel (0) target = $region13
    $region12: #{tpu_custom_call.1} parent=1 // pred_region
      _
    $region13: #{tpu_custom_call.1} parent=1 // pred_fallthru
      _
    // Predicated region
    $region14: #{tpu_custom_call.1} parent=1 // pred_check
      _
    $region15: #{tpu_custom_call.1} parent=1 // pred_check_branch
      %38 = sbr.rel (0) target = $region17
    $region16: #{tpu_custom_call.1} parent=1 // pred_region
      _
    $region17: #{tpu_custom_call.1} parent=1 // pred_fallthru
      _
    // Predicated region
    $region18: #{tpu_custom_call.1} parent=1 // pred_check
      _
    $region19: #{tpu_custom_call.1} parent=1 // pred_check_branch
      %40 = sbr.rel (0) target = $region21
    $region20: #{tpu_custom_call.1} parent=1 // pred_region
      _
    $region21: #{tpu_custom_call.1} parent=1 // pred_fallthru
      _
    // Predicated region
    $region22: #{tpu_custom_call.1} parent=1 // pred_check
      _
    $region23: #{tpu_custom_call.1} parent=1 // pred_check_branch
      %42 = sbr.rel (0) target = $region25
    $region24: #{tpu_custom_call.1} parent=1 // pred_region
      _
    $region25: #{tpu_custom_call.1} parent=1 // pred_fallthru
      _
    // Predicated region
    $region26: #{tpu_custom_call.1} parent=1 // pred_check
      _
    $region27: #{tpu_custom_call.1} parent=1 // pred_check_branch
      %44 = sbr.rel (0) target = $region29
    $region28: #{tpu_custom_call.1} parent=1 // pred_region
      _
    $region29: #{tpu_custom_call.1} parent=1 // pred_fallthru
      _
    // Predicated region
    $region30: #{tpu_custom_call.1} parent=1 // pred_check
      _
    $region31: #{tpu_custom_call.1} parent=1 // pred_check_branch
      %46 = sbr.rel (0) target = $region33
    $region32: #{tpu_custom_call.1} parent=1 // pred_region
      %48 = dma.done [#allocation6], 16
    $region33: #{tpu_custom_call.1} parent=1 // pred_fallthru
      _
    // Predicated region
    $region34: #{tpu_custom_call.1} parent=1 // pred_check
      _
    $region35: #{tpu_custom_call.1} parent=1 // pred_check_branch
      %50 = sbr.rel (0) target = $region37
    $region36: #{tpu_custom_call.1} parent=1 // pred_region
      %52 = dma.done [#allocation4], 16
    $region37: #{tpu_custom_call.1} parent=1 // pred_fallthru
      _
    %53 = sfence
    %p54 = scmp.eq.s32.totalorder 0, 0
    // Predicated region
    $region38: #{tpu_custom_call.1} parent=1 // pred_check
      %p55 = pneg %p54
    $region39: #{tpu_custom_call.1} parent=1 // pred_check_branch
      %57 = sbr.rel (%p55) target = $region41
    $region40: #{tpu_custom_call.1} parent=1 // pred_region
      %58 = vst [vmem:[#allocation2] sm:$0xff] 0.0
      %59 = vst [vmem:[#allocation2 + $0x8] sm:$0xf] 0.0
    $region41: #{tpu_custom_call.1} parent=1 // pred_fallthru
      _
    %v60 = vld [vmem:[#allocation7] sm:$0x1]
    %v61 = vld [vmem:[#allocation2] sm:$0x1]
    %v62 = vadd.f32 %v60, 0.0
    %v63 = vadd.f32 %v61, %v62
    %64 = vst [vmem:[#allocation2] sm:$0x1] %v63
    %v65 = vld [vmem:[#allocation2 + $0x6] sm:$0x1]
    %v66 = vmul.f32 %v60, %v60
    %v67 = vadd.f32 %v66, 0.0
    %v68 = vadd.f32 %v65, %v67
    %69 = vst [vmem:[#allocation2 + $0x6] sm:$0x1] %v68
    %v70 = vld [vmem:[%s2] sm:$0x1]
    %v71 = vld [vmem:[#allocation2 + $0x1] sm:$0x1]
    %v72 = vadd.f32 %v70, 0.0
    %v73 = vadd.f32 %v71, %v72
    %74 = vst [vmem:[#allocation2 + $0x1] sm:$0x1] %v73
    %v75 = vld [vmem:[#allocation2 + $0x7] sm:$0x1]
    %v76 = vmul.f32 %v70, %v70
    %v77 = vadd.f32 %v76, 0.0
    %v78 = vadd.f32 %v75, %v77
    %79 = vst [vmem:[#allocation2 + $0x7] sm:$0x1] %v78
    %v80 = vld [vmem:[%s3] sm:$0x1]
    %v81 = vld [vmem:[#allocation2 + $0x2] sm:$0x1]
    %v82 = vadd.f32 %v80, 0.0
    %v83 = vadd.f32 %v81, %v82
    %84 = vst [vmem:[#allocation2 + $0x2] sm:$0x1] %v83
    %v85 = vld [vmem:[#allocation2 + $0x8] sm:$0x1]
    %v86 = vmul.f32 %v80, %v80
    %v87 = vadd.f32 %v86, 0.0
    %v88 = vadd.f32 %v85, %v87
    %89 = vst [vmem:[#allocation2 + $0x8] sm:$0x1] %v88
    %v90 = vld [vmem:[%s4] sm:$0x1]
    %v91 = vld [vmem:[#allocation2 + $0x3] sm:$0x1]
    %v92 = vadd.f32 %v90, 0.0
    %v93 = vadd.f32 %v91, %v92
    %94 = vst [vmem:[#allocation2 + $0x3] sm:$0x1] %v93
    %v95 = vld [vmem:[#allocation2 + $0x9] sm:$0x1]
    %v96 = vmul.f32 %v90, %v90
    %v97 = vadd.f32 %v96, 0.0
    %v98 = vadd.f32 %v95, %v97
    %99 = vst [vmem:[#allocation2 + $0x9] sm:$0x1] %v98
    %v100 = vld [vmem:[%s5] sm:$0x1]
    %v101 = vld [vmem:[#allocation2 + $0x4] sm:$0x1]
    %v102 = vadd.f32 %v100, 0.0
    %v103 = vadd.f32 %v101, %v102
    %104 = vst [vmem:[#allocation2 + $0x4] sm:$0x1] %v103
    %v105 = vld [vmem:[#allocation2 + $0xa] sm:$0x1]
    %v106 = vmul.f32 %v100, %v100
    %v107 = vadd.f32 %v106, 0.0
    %v108 = vadd.f32 %v105, %v107
    %109 = vst [vmem:[#allocation2 + $0xa] sm:$0x1] %v108
    %v110 = vld [vmem:[%s6] sm:$0x1]
    %v111 = vld [vmem:[#allocation2 + $0x5] sm:$0x1]
    %v112 = vadd.f32 %v110, 0.0
    %v113 = vadd.f32 %v111, %v112
    %114 = vst [vmem:[#allocation2 + $0x5] sm:$0x1] %v113
    %v115 = vld [vmem:[#allocation2 + $0xb] sm:$0x1]
    %v116 = vmul.f32 %v110, %v110
    %v117 = vadd.f32 %v116, 0.0
    %v118 = vadd.f32 %v115, %v117
    %119 = vst [vmem:[#allocation2 + $0xb] sm:$0x1] %v118
    // Predicated region
    $region42: #{tpu_custom_call.1} parent=1 // pred_check
      %p120 = pneg %p54
    $region43: #{tpu_custom_call.1} parent=1 // pred_check_branch
      %122 = sbr.rel (%p120) target = $region45
    $region44: #{tpu_custom_call.1} parent=1 // pred_region
      %v123 = vld [vmem:[#allocation2] sm:$0x1]
      %vm124 = vcmask 1040384
      %v125 = vsel %vm124, %v123, 0.0
      %126 = vadd.xlane.f32.xlu0 %v125
      %v127 = vpop.xlane.xlu0 %126
      %v128 = vld [vmem:[#allocation2 + $0x6] sm:$0x1]
      %v129 = vsel %vm124, %v128, 0.0
      %130 = vadd.xlane.f32.xlu0 %v129
      %v131 = vpop.xlane.xlu0 %130
      %v132 = vmul.f32 %v127, 0.0078125
      %v133 = vmul.f32 %v131, 0.0078125
      %v134 = vld [vmem:[#allocation2 + $0x1] sm:$0x1]
      %v135 = vsel %vm124, %v134, 0.0
      %136 = vadd.xlane.f32.xlu0 %v135
      %v137 = vpop.xlane.xlu0 %136
      %v138 = vld [vmem:[#allocation2 + $0x7] sm:$0x1]
      %v139 = vsel %vm124, %v138, 0.0
      %140 = vadd.xlane.f32.xlu0 %v139
      %v141 = vpop.xlane.xlu0 %140
      %v142 = vmul.f32 %v137, 0.0078125
      %v143 = vmul.f32 %v141, 0.0078125
      %v144 = vld [vmem:[#allocation2 + $0x2] sm:$0x1]
      %v145 = vsel %vm124, %v144, 0.0
      %146 = vadd.xlane.f32.xlu0 %v145
      %v147 = vpop.xlane.xlu0 %146
      %v148 = vld [vmem:[#allocation2 + $0x8] sm:$0x1]
      %v149 = vsel %vm124, %v148, 0.0
      %150 = vadd.xlane.f32.xlu0 %v149
      %v151 = vpop.xlane.xlu0 %150
      %v152 = vmul.f32 %v147, 0.0078125
      %v153 = vmul.f32 %v151, 0.0078125
      %v154 = vld [vmem:[#allocation2 + $0x3] sm:$0x1]
      %v155 = vsel %vm124, %v154, 0.0
      %156 = vadd.xlane.f32.xlu0 %v155
      %v157 = vpop.xlane.xlu0 %156
      %v158 = vld [vmem:[#allocation2 + $0x9] sm:$0x1]
      %v159 = vsel %vm124, %v158, 0.0
      %160 = vadd.xlane.f32.xlu0 %v159
      %v161 = vpop.xlane.xlu0 %160
      %v162 = vmul.f32 %v157, 0.0078125
      %v163 = vmul.f32 %v161, 0.0078125
      %v164 = vld [vmem:[#allocation2 + $0x4] sm:$0x1]
      %v165 = vsel %vm124, %v164, 0.0
      %166 = vadd.xlane.f32.xlu0 %v165
      %v167 = vpop.xlane.xlu0 %166
      %v168 = vld [vmem:[#allocation2 + $0xa] sm:$0x1]
      %v169 = vsel %vm124, %v168, 0.0
      %170 = vadd.xlane.f32.xlu0 %v169
      %v171 = vpop.xlane.xlu0 %170
      %v172 = vmul.f32 %v167, 0.0078125
      %v173 = vmul.f32 %v171, 0.0078125
      %v174 = vld [vmem:[#allocation2 + $0x5] sm:$0x1]
      %v175 = vsel %vm124, %v174, 0.0
      %176 = vadd.xlane.f32.xlu0 %v175
      %v177 = vpop.xlane.xlu0 %176
      %v178 = vld [vmem:[#allocation2 + $0xb] sm:$0x1]
      %v179 = vsel %vm124, %v178, 0.0
      %180 = vadd.xlane.f32.xlu0 %v179
      %v181 = vpop.xlane.xlu0 %180
      %v182 = vmul.f32 %v177, 0.0078125
      %v183 = vmul.f32 %v181, 0.0078125
      %v184 = vadd.f32 %v143, 1.0
      %v185 = vadd.f32 %v184, %v133
      %v186 = vmul.f32 %v142, 2.0
      %v187 = vadd.f32 %v185, %v186
      %v188 = vmul.f32 %v132, 2.0
      %v189 = vsub.f32 %v187, %v188
      %v190 = vmul.f32 %v186, %v132
      %v191 = vsub.f32 %v189, %v190
      %v192 = vadd.f32 %v153, 1.0
      %v193 = vadd.f32 %v192, %v173
      %v194 = vmul.f32 %v152, 2.0
      %v195 = vadd.f32 %v193, %v194
      %v196 = vmul.f32 %v172, 2.0
      %v197 = vsub.f32 %v195, %v196
      %v198 = vmul.f32 %v194, %v172
      %v199 = vsub.f32 %v197, %v198
      %v200 = vadd.f32 %v183, 1.0
      %v201 = vadd.f32 %v200, %v163
      %v202 = vmul.f32 %v182, 2.0
      %v203 = vadd.f32 %v201, %v202
      %v204 = vmul.f32 %v162, 2.0
      %v205 = vsub.f32 %v203, %v204
      %v206 = vmul.f32 %v202, %v162
      %v207 = vsub.f32 %v205, %v206
      %v208 = vadd.f32 %v199, %v207
      %v209 = vadd.f32 %v163, 1.0
      %v210 = vadd.f32 %v209, %v183
      %v211 = vadd.f32 %v210, %v204
      %v212 = vsub.f32 %v211, %v202
      %v213 = vmul.f32 %v204, %v182
      %v214 = vsub.f32 %v212, %v213
      %v215 = vadd.f32 %v173, 1.0
      %v216 = vadd.f32 %v215, %v153
      %v217 = vadd.f32 %v216, %v196
      %v218 = vsub.f32 %v217, %v194
      %v219 = vmul.f32 %v196, %v152
      %v220 = vsub.f32 %v218, %v219
      %v221 = vadd.f32 %v214, %v220
      %s222 = sld [smem:[#allocation3]]
      %v223 = vstv %s222
      %v224 = vmul.f32 %v223, %v191
      %s225 = sld [smem:[#allocation3 + $0x1]]
      %v226 = vstv %s225
      %v227 = vmul.f32 %v226, %v208
      %v228 = vadd.f32 %v224, %v227
      %s229 = sld [smem:[#allocation3 + $0x2]]
      %v230 = vstv %s229
      %v231 = vmul.f32 %v230, %v221
      %v232 = vadd.f32 %v228, %v231
      %vm233 = vcmask 0
      %234 = vst.msk [vmem:[#allocation8] sm:$0x1] %vm233, %v232
    $region45: #{tpu_custom_call.1} parent=1 // pred_fallthru
      _
    // Predicated region
    $region46: #{tpu_custom_call.1} parent=1 // pred_check
      _
    $region47: #{tpu_custom_call.1} parent=1 // pred_check_branch
      %236 = sbr.rel (0) target = $region49
    $region48: #{tpu_custom_call.1} parent=1 // pred_region
      %238 = vsyncadd [#allocation5], 0
      %s240 = sshll.u32 [#allocation8], 4
      %s241 = int_to_ptr.vmem [resolvable:$true] %s240
      %s242 = sshll.u32 %s7, 4
      %s243 = int_to_ptr.hbm [resolvable:$true] %s242
      %245 = dma.vmem_to_hbm [thread:$0]  %s241, 16, %s243, [#allocation5]
    $region49: #{tpu_custom_call.1} parent=1 // pred_fallthru
      _
    // Predicated region
    $region50: #{tpu_custom_call.1} parent=1 // pred_check
      _
    $region51: #{tpu_custom_call.1} parent=1 // pred_check_branch
      %247 = sbr.rel (0) target = $region53
    $region52: #{tpu_custom_call.1} parent=1 // pred_region
      %249 = dma.done [#allocation5], 16
    $region53: #{tpu_custom_call.1} parent=1 // pred_fallthru
      _
    %250 = vsyncpa [#allocation4], 1
    %251 = vsyncpa [#allocation5], 1
    %252 = vsyncpa [#allocation6], 1

</llo_original>
